<compile_context>
chip_gen: v7x
topology: tpu7x:2x2x1
jax: 0.10.0
libtpu: 0.0.40
codegen_flags: <defaults>
</compile_context>

<pallas_src>
import functools

import jax
import jax.numpy as jnp
from jax.experimental import pallas as pl
from jax.experimental.pallas import tpu as pltpu

LANES = 128
SUBLANES = 8
ACC_ROWS = 64                    # resident accumulator rows (8 independent vreg chains)
ALIGN_ELEMS = SUBLANES * LANES   # 1024: kernel prefix alignment
TILE_BYTES_TARGET = 4 << 20      # ~4 MiB per input tile (dtype-aware row count)
MIN_PALLAS_ELEMS = 1 << 20       # below this, plain XLA fused reduce wins


def _round_up(a: int, b: int) -> int:
    return pl.cdiv(a, b) * b


def _num_tensorcores() -> int:
    """2 TensorCores per chip only on v7x; v5e/v6e are single-TC."""
    try:
        kind = jax.devices()[0].device_kind.lower()
    except Exception:
        kind = ""
    return 2 if "7" in kind else 1


def _mae_kernel(x_ref, y_ref, o_ref, *, rows, block_rows, steps_per_core,
                any_masked):
    c = pl.program_id(0)   # parallel (TensorCore) axis
    i = pl.program_id(1)   # arbitrary (reduction) axis

    @pl.when(i == 0)
    def _():
        o_ref[...] = jnp.zeros_like(o_ref)

    # Inputs were DMA'd in their original dtype; upcast on the VPU in-kernel.
    a = jnp.abs(x_ref[...].astype(jnp.float32) - y_ref[...].astype(jnp.float32))

    def accumulate(v):
        # (block_rows, 128) -> (block_rows//ACC_ROWS, ACC_ROWS, 128): the
        # axis-0 sum is ACC_ROWS/8 = 8 independent vreg add chains (ILP); the
        # grouping is whole (8,128) tiles so the reshape is a layout no-op.
        # The expensive cross-lane reduce is deferred to the wrapper.
        o_ref[...] += v.reshape(-1, ACC_ROWS, LANES).sum(axis=0)

    if not any_masked:
        accumulate(a)
    else:
        # Unclamped row offset of this step. It is fully >= rows for the
        # second core's duplicated/clamped overflow steps and straddles `rows`
        # for the partial boundary block; everything else takes the clean
        # unmasked path (no iota/compare/where on the hot path).
        row_start = (c * steps_per_core + i) * block_rows
        needs_mask = row_start + block_rows > rows

        @pl.when(jnp.logical_not(needs_mask))
        def _():
            accumulate(a)

        @pl.when(needs_mask)
        def _():
            # jnp.where *selects* 0.0, so unspecified (even NaN/Inf) data in
            # the OOB region of a partial block cannot leak into the sum.
            row_ids = row_start + jax.lax.broadcasted_iota(jnp.int32, a.shape, 0)
            accumulate(jnp.where(row_ids < rows, a, 0.0))


def mae_loss(x: jax.Array, y: jax.Array, *,
             min_pallas_elems: int = MIN_PALLAS_ELEMS) -> jax.Array:
    """Computes mean(|x - y|) (torch.mean(torch.abs(input - target))) as f32."""
    assert x.shape == y.shape, "input and target must have the same shape"
    n = x.size
    if n == 0:
        return jnp.float32(jnp.nan)  # matches torch.mean of an empty tensor

    xf = jnp.ravel(x)
    yf = jnp.ravel(y)

    # Largest 1024-aligned prefix goes through the kernel; the tail is plain JAX.
    n_main = (n // ALIGN_ELEMS) * ALIGN_ELEMS

    # Small-input fallback: launch/grid overhead dominates; XLA's fused
    # elementwise + reduce is already bandwidth-optimal here.
    if n_main < max(min_pallas_elems, ACC_ROWS * LANES):
        return jnp.mean(jnp.abs(xf.astype(jnp.float32) - yf.astype(jnp.float32)))

    ncores = _num_tensorcores()

    rows = n_main // LANES                 # multiple of SUBLANES
    x2 = xf[:n_main].reshape(rows, LANES)
    y2 = yf[:n_main].reshape(rows, LANES)

    # Dtype-aware tile rows from a constant byte budget, multiple of ACC_ROWS,
    # split across the core axis, and never larger than the array.
    itemsize = max(x.dtype.itemsize, y.dtype.itemsize)
    target_rows = max(ACC_ROWS,
                      (TILE_BYTES_TARGET // (LANES * itemsize)) // ACC_ROWS * ACC_ROWS)
    block_rows = min(target_rows, _round_up(pl.cdiv(rows, ncores), ACC_ROWS))
    block_rows = min(block_rows, (rows // ACC_ROWS) * ACC_ROWS)

    steps_total = pl.cdiv(rows, block_rows)
    steps_per_core = pl.cdiv(steps_total, ncores)
    coverage = ncores * steps_per_core * block_rows
    any_masked = coverage != rows          # static: does any block hold invalid rows?
    last_block = steps_total - 1

    def in_map(c, i):
        # Clamp so the second core's overflow steps stay in-bounds; their
        # duplicated contribution is zeroed by the in-kernel row mask.
        return (jnp.minimum(c * steps_per_core + i, last_block), 0)

    kernel = functools.partial(
        _mae_kernel, rows=rows, block_rows=block_rows,
        steps_per_core=steps_per_core, any_masked=any_masked)

    # VMEM budget: 2 inputs x 2 pipeline buffers (original dtype) + headroom
    # for the in-kernel f32 temporaries.  Max case (bf16 tiles) is ~42 MiB:
    # above v5e's 16 MiB / v6e's 32 MiB defaults, below v7x's 64 MiB physical.
    tile_in_bytes = block_rows * LANES * itemsize
    tile_f32_bytes = block_rows * LANES * 4
    vmem_limit = max(32 << 20,
                     int(2 * 2 * tile_in_bytes + 3 * tile_f32_bytes + (2 << 20)))

    partials = pl.pallas_call(
        kernel,
        out_shape=jax.ShapeDtypeStruct((ncores, ACC_ROWS, LANES), jnp.float32),
        grid_spec=pltpu.PrefetchScalarGridSpec(
            num_scalar_prefetch=0,
            grid=(ncores, steps_per_core),
            in_specs=[
                pl.BlockSpec((block_rows, LANES), in_map),
                pl.BlockSpec((block_rows, LANES), in_map),
            ],
            out_specs=pl.BlockSpec((None, ACC_ROWS, LANES),
                                   lambda c, i: (c, 0, 0)),
        ),
        compiler_params=pltpu.CompilerParams(
            # Leading axis shards across TensorCores on v7x (size 1 elsewhere).
            dimension_semantics=("parallel", "arbitrary"),
            vmem_limit_bytes=vmem_limit,
        ),
    )(x2, y2)

    total = jnp.sum(partials)

    # Ragged tail (< 1024 elements) in plain JAX — no padded copies of the
    # full inputs are ever materialized in HBM.
    if n_main != n:
        xt = xf[n_main:].astype(jnp.float32)
        yt = yf[n_main:].astype(jnp.float32)
        total = total + jnp.sum(jnp.abs(xt - yt))

    return total / jnp.float32(n)


if __name__ == "__main__":
    key = jax.random.PRNGKey(0)
    k = jax.random.split(key, 8)

    # 1) Primary small test (module-consistent shape): small-input fallback path.
    shape = (2, 4, 16, 16)
    x = jax.random.normal(k[0], shape, dtype=jnp.float32)
    t = jax.random.normal(k[1], shape, dtype=jnp.float32)
    loss = mae_loss(x, t)
    ref = jnp.mean(jnp.abs(x - t))
    assert jnp.allclose(loss, ref, rtol=1e-5, atol=1e-6), (loss, ref)

    # 2) Force the Pallas path on a ragged shape: exercises the aligned-prefix
    #    kernel (partial boundary block -> masked pl.when branch) + JAX tail.
    xr = jax.random.normal(k[2], (3, 33, 129), dtype=jnp.float32)
    tr = jax.random.normal(k[3], (3, 33, 129), dtype=jnp.float32)
    loss_r = mae_loss(xr, tr, min_pallas_elems=0)
    ref_r = jnp.mean(jnp.abs(xr - tr))
    assert jnp.allclose(loss_r, ref_r, rtol=1e-5, atol=1e-6), (loss_r, ref_r)

    # 3) bf16 inputs stream into the kernel in bf16 (halved DMA bytes); the
    #    f32 upcast happens on the VPU inside the kernel.
    xb = jax.random.normal(k[4], (4, 64, 128), dtype=jnp.bfloat16)
    tb = jax.random.normal(k[5], (4, 64, 128), dtype=jnp.bfloat16)
    loss_b = mae_loss(xb, tb, min_pallas_elems=0)
    ref_b = jnp.mean(jnp.abs(xb.astype(jnp.float32) - tb.astype(jnp.float32)))
    assert jnp.allclose(loss_b, ref_b, rtol=1e-5, atol=1e-6), (loss_b, ref_b)

    # 4) Default-threshold Pallas run (~2M elements, full-size tiles, no mask).
    xl = jax.random.normal(k[6], (4, 4, 512, 256), dtype=jnp.float32)
    tl = jax.random.normal(k[7], (4, 4, 512, 256), dtype=jnp.float32)
    loss_l = mae_loss(xl, tl)
    ref_l = jnp.mean(jnp.abs(xl - tl))
    assert jnp.allclose(loss_l, ref_l, rtol=1e-4, atol=1e-6), (loss_l, ref_l)

    jax.block_until_ready((loss, loss_r, loss_b, loss_l))
    print("KERNEL_OK")
</pallas_src>

<mosaic_0001>
module attributes {stable_mosaic.version = 11 : i64} {
  func.func @_mae_kernel(%arg0: i32, %arg1: i32, %arg2: memref<64x128xf32, #tpu.memory_space<vmem>>, %arg3: memref<64x128xf32, #tpu.memory_space<vmem>>, %arg4: memref<1x64x128xf32, #tpu.memory_space<vmem>>) attributes {dimension_semantics = [#tpu.dimension_semantics<parallel>, #tpu.dimension_semantics<arbitrary>], iteration_bounds = array<i64: 1, 2>, scalar_prefetch = 0 : i64, scratch_operands = 0 : i64, tpu.core_type = #tpu.core_type<tc>, window_params = [{transform_indices = @transform_0, window_bounds = array<i64: 64, 128>}, {transform_indices = @transform_1, window_bounds = array<i64: 64, 128>}, {transform_indices = @transform_2, window_bounds = array<i64: 1, 64, 128>}]} {
    %c0_i32 = arith.constant 0 : i32
    %0 = arith.cmpi eq, %arg1, %c0_i32 : i32
    %1 = arith.extui %0 : i1 to i32
    %c0_i32_0 = arith.constant 0 : i32
    %2 = arith.cmpi ne, %1, %c0_i32_0 : i32
    scf.if %2 {
      %cst = arith.constant 0.000000e+00 : f32
      %17 = vector.broadcast %cst : f32 to vector<64x128xf32>
      %c0_7 = arith.constant 0 : index
      %c0_8 = arith.constant 0 : index
      %c0_9 = arith.constant 0 : index
      %18 = vector.load %arg4[%c0_7, %c0_8, %c0_9] : memref<1x64x128xf32, #tpu.memory_space<vmem>>, vector<1x64x128xf32>
      %19 = vector.shape_cast %18 : vector<1x64x128xf32> to vector<64x128xf32>
      %20 = vector.shape_cast %17 : vector<64x128xf32> to vector<1x64x128xf32>
      tpu.vector_store %arg4[%c0_7, %c0_8, %c0_9], %20 {strides = array<i32>} : memref<1x64x128xf32, #tpu.memory_space<vmem>>, vector<1x64x128xf32>,
    } else {
    }
    %c0 = arith.constant 0 : index
    %c0_1 = arith.constant 0 : index
    %3 = vector.load %arg2[%c0, %c0_1] : memref<64x128xf32, #tpu.memory_space<vmem>>, vector<64x128xf32>
    %c0_2 = arith.constant 0 : index
    %c0_3 = arith.constant 0 : index
    %4 = vector.load %arg3[%c0_2, %c0_3] : memref<64x128xf32, #tpu.memory_space<vmem>>, vector<64x128xf32>
    %5 = arith.subf %3, %4 : vector<64x128xf32>
    %6 = math.absf %5 : vector<64x128xf32>
    %c2_i32 = arith.constant 2 : i32
    %7 = arith.muli %arg0, %c2_i32 : i32
    %8 = arith.addi %7, %arg1 : i32
    %c64_i32 = arith.constant 64 : i32
    %9 = arith.muli %8, %c64_i32 : i32
    %c64_i32_4 = arith.constant 64 : i32
    %10 = arith.addi %9, %c64_i32_4 : i32
    %c96_i32 = arith.constant 96 : i32
    %11 = arith.cmpi sgt, %10, %c96_i32 : i32
    %true = arith.constant true
    %12 = arith.xori %11, %true : i1
    %13 = arith.extui %12 : i1 to i32
    %c0_i32_5 = arith.constant 0 : i32
    %14 = arith.cmpi ne, %13, %c0_i32_5 : i32
    scf.if %14 {
      %c0_7 = arith.constant 0 : index
      %c0_8 = arith.constant 0 : index
      %c0_9 = arith.constant 0 : index
      %17 = vector.load %arg4[%c0_7, %c0_8, %c0_9] : memref<1x64x128xf32, #tpu.memory_space<vmem>>, vector<1x64x128xf32>
      %18 = vector.shape_cast %17 : vector<1x64x128xf32> to vector<64x128xf32>
      %19 = vector.shape_cast %6 : vector<64x128xf32> to vector<1x64x128xf32>
      %cst = arith.constant dense<0.000000e+00> : vector<64x128xf32>
      %20 = vector.multi_reduction <add>, %19, %cst [0] : vector<1x64x128xf32> to vector<64x128xf32>
      %21 = arith.addf %18, %20 : vector<64x128xf32>
      %c0_10 = arith.constant 0 : index
      %c0_11 = arith.constant 0 : index
      %c0_12 = arith.constant 0 : index
      %22 = vector.load %arg4[%c0_10, %c0_11, %c0_12] : memref<1x64x128xf32, #tpu.memory_space<vmem>>, vector<1x64x128xf32>
      %23 = vector.shape_cast %22 : vector<1x64x128xf32> to vector<64x128xf32>
      %24 = vector.shape_cast %21 : vector<64x128xf32> to vector<1x64x128xf32>
      tpu.vector_store %arg4[%c0_10, %c0_11, %c0_12], %24 {strides = array<i32>} : memref<1x64x128xf32, #tpu.memory_space<vmem>>, vector<1x64x128xf32>,
    } else {
    }
    %15 = arith.extui %11 : i1 to i32
    %c0_i32_6 = arith.constant 0 : i32
    %16 = arith.cmpi ne, %15, %c0_i32_6 : i32
    scf.if %16 {
      %17 = tpu.iota {dimensions = array<i32: 0>} : vector<64x128xi32>
      %18 = vector.broadcast %9 : i32 to vector<64x128xi32>
      %19 = arith.addi %18, %17 : vector<64x128xi32>
      %c96_i32_7 = arith.constant 96 : i32
      %20 = vector.broadcast %c96_i32_7 : i32 to vector<64x128xi32>
      %21 = arith.cmpi slt, %19, %20 : vector<64x128xi32>
      %cst = arith.constant 0.000000e+00 : f32
      %22 = vector.broadcast %cst : f32 to vector<64x128xf32>
      %23 = arith.select %21, %6, %22 : vector<64x128xi1>, vector<64x128xf32>
      %c0_8 = arith.constant 0 : index
      %c0_9 = arith.constant 0 : index
      %c0_10 = arith.constant 0 : index
      %24 = vector.load %arg4[%c0_8, %c0_9, %c0_10] : memref<1x64x128xf32, #tpu.memory_space<vmem>>, vector<1x64x128xf32>
      %25 = vector.shape_cast %24 : vector<1x64x128xf32> to vector<64x128xf32>
      %26 = vector.shape_cast %23 : vector<64x128xf32> to vector<1x64x128xf32>
      %cst_11 = arith.constant dense<0.000000e+00> : vector<64x128xf32>
      %27 = vector.multi_reduction <add>, %26, %cst_11 [0] : vector<1x64x128xf32> to vector<64x128xf32>
      %28 = arith.addf %25, %27 : vector<64x128xf32>
      %c0_12 = arith.constant 0 : index
      %c0_13 = arith.constant 0 : index
      %c0_14 = arith.constant 0 : index
      %29 = vector.load %arg4[%c0_12, %c0_13, %c0_14] : memref<1x64x128xf32, #tpu.memory_space<vmem>>, vector<1x64x128xf32>
      %30 = vector.shape_cast %29 : vector<1x64x128xf32> to vector<64x128xf32>
      %31 = vector.shape_cast %28 : vector<64x128xf32> to vector<1x64x128xf32>
      tpu.vector_store %arg4[%c0_12, %c0_13, %c0_14], %31 {strides = array<i32>} : memref<1x64x128xf32, #tpu.memory_space<vmem>>, vector<1x64x128xf32>,
    } else {
    }
    return
  }
  func.func @transform_0(%arg0: i32, %arg1: i32) -> (i32, i32) {
    %c2_i32 = arith.constant 2 : i32
    %0 = arith.muli %arg0, %c2_i32 : i32
    %1 = arith.addi %0, %arg1 : i32
    %c1_i32 = arith.constant 1 : i32
    %2 = arith.minsi %1, %c1_i32 : i32
    %c0_i32 = arith.constant 0 : i32
    %c0_i32_0 = arith.constant 0 : i32
    return %2, %c0_i32 : i32, i32
  }
  func.func @transform_1(%arg0: i32, %arg1: i32) -> (i32, i32) {
    %c2_i32 = arith.constant 2 : i32
    %0 = arith.muli %arg0, %c2_i32 : i32
    %1 = arith.addi %0, %arg1 : i32
    %c1_i32 = arith.constant 1 : i32
    %2 = arith.minsi %1, %c1_i32 : i32
    %c0_i32 = arith.constant 0 : i32
    %c0_i32_0 = arith.constant 0 : i32
    return %2, %c0_i32 : i32, i32
  }
  func.func @transform_2(%arg0: i32, %arg1: i32) -> (i32, i32, i32) {
    %c0_i32 = arith.constant 0 : i32
    %c0_i32_0 = arith.constant 0 : i32
    %c0_i32_1 = arith.constant 0 : i32
    return %arg0, %c0_i32, %c0_i32_0 : i32, i32, i32
  }
}

</mosaic_0001>

<llo_original>
// kernel: tpu_custom_call.1
$region0: #{tpu_custom_call.1}
  #allocation0 [shape = 'u32[]', space=smem, size = 0x4, offset = 0x4, fixed_abs, tag = 'smem constant byte address 0x4 - core index']
  #allocation1 [shape = 'u32[144,128]{1,0:T(1,128)}', space=vmem, size = 0x12000, scoped, tag = 'internal scratch']
  %s0 = inlined_call_operand.hbm [shape: f32[96,128], index: 0, kind: input, shape index: {}]
  %s1 = inlined_call_operand.hbm [shape: f32[96,128], index: 1, kind: input, shape index: {}]
  %s2 = inlined_call_operand.hbm [shape: f32[1,64,128], index: 2, kind: output, shape index: {}]
  %s3 = sld [smem:[#allocation0]]
  $region61: #{tpu_custom_call.1} parent=0
    _
  %s5 = ssub.s32 1, %s3
  %s6 = scalar_select 0, %s5, %s3
  $region1: #{tpu_custom_call.1} parent=0
    #allocation2 [shape = 'u8[65536]{0}', space=vmem, size = 0x10000, scoped, tag = 'input window, operand 0']
    #allocation3 [shape = 's32[2]{0}', space=sflag, size = 0x8, scoped, tag = 'scoped memory for tpu_custom_call.1']
    #allocation4 [shape = 's32[2]{0}', space=sflag, size = 0x8, scoped, tag = 'scoped memory for tpu_custom_call.1']
    #allocation5 [shape = 'u8[65536]{0}', space=vmem, size = 0x10000, scoped, tag = 'input window, operand 1']
    #allocation6 [shape = 's32[2]{0}', space=sflag, size = 0x8, scoped, tag = 'scoped memory for tpu_custom_call.1']
    #allocation7 [shape = 'u8[32768]{0}', space=vmem, size = 0x8000, scoped, tag = 'output window, operand 0, single buffered']
    %7 = vsyncpa [#allocation3], 0
    %s8 = scalar_lea.sflag [#allocation3], 1
    %9 = vsyncpa %s8, 0
    %10 = vsyncpa [#allocation6], 0
    %s11 = scalar_lea.sflag [#allocation6], 1
    %12 = vsyncpa %s11, 0
    %13 = vsyncpa [#allocation4], 0
    loop: start=0, step=1, limit=4
    $region2: #{tpu_custom_call.1} parent=1 // loop_pre_header
      _
    $region3: #{tpu_custom_call.1} parent=1 // loop_header
      %s15 = sphi 0, %s19
      %p16 = scmp.ge.s32.totalorder %s15, 4
      %s22 = sphi 0, %s34
      %s23 = sphi 0, %s30
      %s24 = sphi 0, %s22
      %s25 = sphi 0, %s23
      %s26 = sphi 0, %s24
      %s27 = sphi 0, %s25
      %s45 = sphi 0, %s47
      %s48 = sphi 0, %s45
      %s49 = sphi 0, %s48
      %s65 = sphi 0, %s49
      %s79 = sphi 0, %s81
      %s82 = sphi 0, %s79
      %s83 = sphi 0, %s82
      %s99 = sphi 0, %s83
      %s105 = sphi 0, %s107
      %s108 = sphi 0, %s105
      %s109 = sphi 0, %s108
      %s125 = sphi 0, %s109
    $region4: #{tpu_custom_call.1} parent=1 // loop_header_branch
      %18 = sbr.rel (%p16) target = $region8
    $region5: #{tpu_custom_call.1} parent=1 // loop_body
      %s20 = ssub.s32 %s15, 1
      %s21 = ssub.s32 %s15, 2
      %s28 = sadd.s32 1, %s23
      %p29 = scmp.ge.s32.totalorder %s28, 2
      %s30 = scalar_select %p29, 0, %s28
      %s31 = sadd.s32 1, %s22
      %s32 = scalar_select %p29, %s31, %s22
      %p33 = scmp.ge.s32.totalorder %s32, 1
      %s34 = scalar_select %p33, 0, %s32
      %s35 = smul.u32 %s22, 2
      %s36 = sadd.s32 %s35, %s23
      %p37 = scmp.lt.s32.totalorder %s36, 1
      %s38 = scalar_select %p37, %s36, 1
      %s39 = smul.u32 %s34, 2
      %s40 = sadd.s32 %s39, %s30
      %p41 = scmp.lt.s32.totalorder %s40, 1
      %s42 = scalar_select %p41, %s40, 1
      %s43 = ssub.s32 %s38, %s42
      %p44 = scmp.eq.s32.totalorder %s43, 0
      %s46 = sadd.s32 %s45, 1
      %s47 = scalar_select %p44, %s45, %s46
      %p50 = pneg %p44
      %p51 = scmp.eq.s32.totalorder %s15, 1
      %p52 = por %p50, %p51
      %p53 = scmp.ne.s32.totalorder %s45, %s48
      %p54 = scmp.eq.s32.totalorder %s15, 0
      %p55 = por %p53, %p54
      %p56 = scmp.ne.s32.totalorder %s45, %s48
      %p57 = scmp.eq.s32.totalorder %s20, 1
      %p58 = por %p56, %p57
      %p59 = scmp.ne.s32.totalorder %s48, %s49
      %p60 = scmp.eq.s32.totalorder %s20, 0
      %p61 = por %p59, %p60
      %p62 = scmp.ne.s32.totalorder %s48, %s49
      %p63 = scmp.eq.s32.totalorder %s21, 1
      %p64 = por %p62, %p63
      %p66 = scmp.ne.s32.totalorder %s49, %s65
      %p67 = scmp.eq.s32.totalorder %s21, 0
      %p68 = por %p66, %p67
      %s69 = smul.u32 %s22, 2
      %s70 = sadd.s32 %s69, %s23
      %p71 = scmp.lt.s32.totalorder %s70, 1
      %s72 = scalar_select %p71, %s70, 1
      %s73 = smul.u32 %s34, 2
      %s74 = sadd.s32 %s73, %s30
      %p75 = scmp.lt.s32.totalorder %s74, 1
      %s76 = scalar_select %p75, %s74, 1
      %s77 = ssub.s32 %s72, %s76
      %p78 = scmp.eq.s32.totalorder %s77, 0
      %s80 = sadd.s32 %s79, 1
      %s81 = scalar_select %p78, %s79, %s80
      %p84 = pneg %p78
      %p85 = scmp.eq.s32.totalorder %s15, 1
      %p86 = por %p84, %p85
      %p87 = scmp.ne.s32.totalorder %s79, %s82
      %p88 = scmp.eq.s32.totalorder %s15, 0
      %p89 = por %p87, %p88
      %p90 = scmp.ne.s32.totalorder %s79, %s82
      %p91 = scmp.eq.s32.totalorder %s20, 1
      %p92 = por %p90, %p91
      %p93 = scmp.ne.s32.totalorder %s82, %s83
      %p94 = scmp.eq.s32.totalorder %s20, 0
      %p95 = por %p93, %p94
      %p96 = scmp.ne.s32.totalorder %s82, %s83
      %p97 = scmp.eq.s32.totalorder %s21, 1
      %p98 = por %p96, %p97
      %p100 = scmp.ne.s32.totalorder %s83, %s99
      %p101 = scmp.eq.s32.totalorder %s21, 0
      %p102 = por %p100, %p101
      %s103 = ssub.s32 %s22, %s34
      %p104 = scmp.eq.s32.totalorder %s103, 0
      %s106 = sadd.s32 %s105, 1
      %s107 = scalar_select %p104, %s105, %s106
      %p110 = pneg %p104
      %p111 = scmp.eq.s32.totalorder %s15, 1
      %p112 = por %p110, %p111
      %p113 = scmp.ne.s32.totalorder %s105, %s108
      %p114 = scmp.eq.s32.totalorder %s15, 0
      %p115 = por %p113, %p114
      %p116 = scmp.ne.s32.totalorder %s105, %s108
      %p117 = scmp.eq.s32.totalorder %s20, 1
      %p118 = por %p116, %p117
      %p119 = scmp.ne.s32.totalorder %s108, %s109
      %p120 = scmp.eq.s32.totalorder %s20, 0
      %p121 = por %p119, %p120
      %p122 = scmp.ne.s32.totalorder %s108, %s109
      %p123 = scmp.eq.s32.totalorder %s21, 1
      %p124 = por %p122, %p123
      %p126 = scmp.ne.s32.totalorder %s109, %s125
      %p127 = scmp.eq.s32.totalorder %s21, 0
      %p128 = por %p126, %p127
      %p129 = scmp.le.s32.totalorder 1, %s15
      %p130 = scmp.lt.s32.totalorder %s15, 3
      %p131 = pnand %p129, %p130
      %p132 = pneg %p131
      // Predicated region
      $region9: #{tpu_custom_call.1} parent=5 // pred_check
        _
      $region10: #{tpu_custom_call.1} parent=5 // pred_check_branch
        %134 = sbr.rel (%p131) target = $region12
      $region11: #{tpu_custom_call.1} parent=5 // pred_region
        %s135 = ssub.s32 %s15, 1
      $region12: #{tpu_custom_call.1} parent=5 // pred_fallthru
        _
      %p136 = scmp.lt.s32.totalorder %s15, 2
      // Predicated region
      $region13: #{tpu_custom_call.1} parent=5 // pred_check
        %p137 = pneg %p136
      $region14: #{tpu_custom_call.1} parent=5 // pred_check_branch
        %139 = sbr.rel (%p137) target = $region16
      $region15: #{tpu_custom_call.1} parent=5 // pred_region
        // Predicated region
        $region17: #{tpu_custom_call.1} parent=15 // pred_check
          %p140 = pneg %p55
        $region18: #{tpu_custom_call.1} parent=15 // pred_check_branch
          %142 = sbr.rel (%p140) target = $region20
        $region19: #{tpu_custom_call.1} parent=15 // pred_region
          %s143 = sand.u32 %s45, 1
          %s144 = scalar_lea.sflag [#allocation3], %s143
          %s145 = sand.u32 %s45, 1
          %s146 = smul.addr %s145, 64
          %s147 = scalar_lea.vmem [#allocation2], %s146
          %s148 = smul.u32 %s22, 2
          %s149 = sadd.s32 %s148, %s23
          %p150 = scmp.lt.s32.totalorder %s149, 1
          %s151 = scalar_select %p150, %s149, 1
          %s152 = smul.u32 8, %s151
          %s153 = ssub.s32 12, %s152
          %p154 = scmp.lt.s32.totalorder %s153, 8
          %s155 = scalar_select %p154, %s153, 8
          %s156 = smul.u32 128, %s155
          %s158 = ssub.s32 1024, %s156
          %159 = vsyncadd %s144, %s158
          %p160 = scmp.ne.s32.totalorder 0, %s156
          %s161 = smul.addr %s152, 128
          %s162 = scalar_lea.hbm %s0, %s161
          %s163 = smul.u32 8, %s155
          %s164 = sshll.u32 %s147, 4
          %s165 = int_to_ptr.vmem [resolvable:$true] %s164
          %s166 = sshll.u32 %s163, 4
          %170 = dma.hbm_to_vmem [thread:$0]  (%p160), %s162, %s166, %s165, %s144, 128, 128, 8
        $region20: #{tpu_custom_call.1} parent=15 // pred_fallthru
          _
        // Predicated region
        $region21: #{tpu_custom_call.1} parent=15 // pred_check
          %p171 = pneg %p89
        $region22: #{tpu_custom_call.1} parent=15 // pred_check_branch
          %173 = sbr.rel (%p171) target = $region24
        $region23: #{tpu_custom_call.1} parent=15 // pred_region
          %s174 = sand.u32 %s79, 1
          %s175 = scalar_lea.sflag [#allocation6], %s174
          %s176 = sand.u32 %s79, 1
          %s177 = smul.addr %s176, 64
          %s178 = scalar_lea.vmem [#allocation5], %s177
          %s179 = smul.u32 %s22, 2
          %s180 = sadd.s32 %s179, %s23
          %p181 = scmp.lt.s32.totalorder %s180, 1
          %s182 = scalar_select %p181, %s180, 1
          %s183 = smul.u32 8, %s182
          %s184 = ssub.s32 12, %s183
          %p185 = scmp.lt.s32.totalorder %s184, 8
          %s186 = scalar_select %p185, %s184, 8
          %s187 = smul.u32 128, %s186
          %s189 = ssub.s32 1024, %s187
          %190 = vsyncadd %s175, %s189
          %p191 = scmp.ne.s32.totalorder 0, %s187
          %s192 = smul.addr %s183, 128
          %s193 = scalar_lea.hbm %s1, %s192
          %s194 = smul.u32 8, %s186
          %s195 = sshll.u32 %s178, 4
          %s196 = int_to_ptr.vmem [resolvable:$true] %s195
          %s197 = sshll.u32 %s194, 4
          %201 = dma.hbm_to_vmem [thread:$0]  (%p191), %s193, %s197, %s196, %s175, 128, 128, 8
        $region24: #{tpu_custom_call.1} parent=15 // pred_fallthru
          _
      $region16: #{tpu_custom_call.1} parent=5 // pred_fallthru
        _
      %p202 = scmp.le.s32.totalorder 1, %s15
      %p203 = scmp.lt.s32.totalorder %s15, 3
      %p204 = pnand %p202, %p203
      %p205 = pneg %p204
      // Predicated region
      $region25: #{tpu_custom_call.1} parent=5 // pred_check
        _
      $region26: #{tpu_custom_call.1} parent=5 // pred_check_branch
        %207 = sbr.rel (%p204) target = $region28
      $region27: #{tpu_custom_call.1} parent=5 // pred_region
        %s208 = ssub.s32 %s15, 1
        %s209 = sand.u32 %s48, 1
        %s210 = scalar_lea.sflag [#allocation3], %s209
        %s211 = sand.u32 %s48, 1
        %s212 = smul.addr %s211, 64
        %s213 = scalar_lea.vmem [#allocation2], %s212
        // Predicated region
        $region29: #{tpu_custom_call.1} parent=27 // pred_check
          %p214 = pneg %p61
        $region30: #{tpu_custom_call.1} parent=27 // pred_check_branch
          %216 = sbr.rel (%p214) target = $region32
        $region31: #{tpu_custom_call.1} parent=27 // pred_region
          %217 = dma.done %s210, 1024
        $region32: #{tpu_custom_call.1} parent=27 // pred_fallthru
          _
        %s218 = sand.u32 %s82, 1
        %s219 = scalar_lea.sflag [#allocation6], %s218
        %s220 = sand.u32 %s82, 1
        %s221 = smul.addr %s220, 64
        %s222 = scalar_lea.vmem [#allocation5], %s221
        // Predicated region
        $region33: #{tpu_custom_call.1} parent=27 // pred_check
          %p223 = pneg %p95
        $region34: #{tpu_custom_call.1} parent=27 // pred_check_branch
          %225 = sbr.rel (%p223) target = $region36
        $region35: #{tpu_custom_call.1} parent=27 // pred_region
          %226 = dma.done %s219, 1024
        $region36: #{tpu_custom_call.1} parent=27 // pred_fallthru
          _
        %s227 = sand.u32 %s48, 1
        %s228 = scalar_lea.sflag [#allocation3], %s227
        %s229 = sand.u32 %s48, 1
        %s230 = smul.addr %s229, 64
        %s231 = scalar_lea.vmem [#allocation2], %s230
        %p232 = pneg %p61
        %p233 = pneg %p58
        %s234 = sand.u32 %s82, 1
        %s235 = scalar_lea.sflag [#allocation6], %s234
        %s236 = sand.u32 %s82, 1
        %s237 = smul.addr %s236, 64
        %s238 = scalar_lea.vmem [#allocation5], %s237
        %p239 = pneg %p95
        %p240 = pneg %p92
        %p241 = pneg %p121
        %p242 = pneg %p118
        %s243 = smul.u32 %s24, 2
        %s244 = sadd.s32 %s243, %s25
        %p245 = scmp.lt.s32.totalorder %s244, 1
        %s246 = scalar_select %p245, %s244, 1
        %s247 = smul.u32 8, %s246
        %s248 = ssub.s32 12, %s247
        %p249 = scmp.lt.s32.totalorder %s248, 8
        %s250 = scalar_select %p249, %s248, 8
        %s251 = smul.u32 128, %s250
        %s252 = smul.u32 %s24, 2
        %s253 = sadd.s32 %s252, %s25
        %p254 = scmp.lt.s32.totalorder %s253, 1
        %s255 = scalar_select %p254, %s253, 1
        %s256 = smul.u32 8, %s255
        %s257 = ssub.s32 12, %s256
        %p258 = scmp.lt.s32.totalorder %s257, 8
        %s259 = scalar_select %p258, %s257, 8
        %s260 = smul.u32 128, %s259
        %p261 = scmp.eq.s32.totalorder %s25, 0
        // Predicated region
        $region37: #{tpu_custom_call.1} parent=27 // pred_check
          %p262 = pneg %p261
        $region38: #{tpu_custom_call.1} parent=27 // pred_check_branch
          %264 = sbr.rel (%p262) target = $region40
        $region39: #{tpu_custom_call.1} parent=27 // pred_region
          %265 = vst [vmem:[#allocation7] sm:$0xff] 0.0
          %266 = vst [vmem:[#allocation7 + $0x8] sm:$0xff] 0.0
          %267 = vst [vmem:[#allocation7 + $0x10] sm:$0xff] 0.0
          %268 = vst [vmem:[#allocation7 + $0x18] sm:$0xff] 0.0
          %269 = vst [vmem:[#allocation7 + $0x20] sm:$0xff] 0.0
          %270 = vst [vmem:[#allocation7 + $0x28] sm:$0xff] 0.0
          %271 = vst [vmem:[#allocation7 + $0x30] sm:$0xff] 0.0
          %272 = vst [vmem:[#allocation7 + $0x38] sm:$0xff] 0.0
        $region40: #{tpu_custom_call.1} parent=27 // pred_fallthru
          _
        %v273 = vld [vmem:[%s213] sm:$0xff]
        %v274 = vld [vmem:[%s213 + $0x8] sm:$0xff]
        %v275 = vld [vmem:[%s213 + $0x10] sm:$0xff]
        %v276 = vld [vmem:[%s213 + $0x18] sm:$0xff]
        %v277 = vld [vmem:[%s213 + $0x20] sm:$0xff]
        %v278 = vld [vmem:[%s213 + $0x28] sm:$0xff]
        %v279 = vld [vmem:[%s213 + $0x30] sm:$0xff]
        %v280 = vld [vmem:[%s213 + $0x38] sm:$0xff]
        %v281 = vld [vmem:[%s222] sm:$0xff]
        %v282 = vld [vmem:[%s222 + $0x8] sm:$0xff]
        %v283 = vld [vmem:[%s222 + $0x10] sm:$0xff]
        %v284 = vld [vmem:[%s222 + $0x18] sm:$0xff]
        %v285 = vld [vmem:[%s222 + $0x20] sm:$0xff]
        %v286 = vld [vmem:[%s222 + $0x28] sm:$0xff]
        %v287 = vld [vmem:[%s222 + $0x30] sm:$0xff]
        %v288 = vld [vmem:[%s222 + $0x38] sm:$0xff]
        %v289 = vsub.f32 %v273, %v281
        %v290 = vsub.f32 %v274, %v282
        %v291 = vsub.f32 %v275, %v283
        %v292 = vsub.f32 %v276, %v284
        %v293 = vsub.f32 %v277, %v285
        %v294 = vsub.f32 %v278, %v286
        %v295 = vsub.f32 %v279, %v287
        %v296 = vsub.f32 %v280, %v288
        %v297 = vand.u32 2147483647, %v289
        %v298 = vand.u32 2147483647, %v290
        %v299 = vand.u32 2147483647, %v291
        %v300 = vand.u32 2147483647, %v292
        %v301 = vand.u32 2147483647, %v293
        %v302 = vand.u32 2147483647, %v294
        %v303 = vand.u32 2147483647, %v295
        %v304 = vand.u32 2147483647, %v296
        %s305 = smul.u32 %s24, 2
        %s306 = sadd.s32 %s305, %s25
        %s307 = smul.u32 %s306, 64
        %s308 = sadd.s32 %s307, 64
        %p309 = scmp.gt.s32.totalorder %s308, 96
        %p310 = scmp.le.s32.totalorder %s308, 96
        // Predicated region
        $region41: #{tpu_custom_call.1} parent=27 // pred_check
          %p311 = pneg %p310
        $region42: #{tpu_custom_call.1} parent=27 // pred_check_branch
          %313 = sbr.rel (%p311) target = $region44
        $region43: #{tpu_custom_call.1} parent=27 // pred_region
          %v314 = vld [vmem:[#allocation7] sm:$0xff]
          %v315 = vld [vmem:[#allocation7 + $0x8] sm:$0xff]
          %v316 = vld [vmem:[#allocation7 + $0x10] sm:$0xff]
          %v317 = vld [vmem:[#allocation7 + $0x18] sm:$0xff]
          %v318 = vld [vmem:[#allocation7 + $0x20] sm:$0xff]
          %v319 = vld [vmem:[#allocation7 + $0x28] sm:$0xff]
          %v320 = vld [vmem:[#allocation7 + $0x30] sm:$0xff]
          %v321 = vld [vmem:[#allocation7 + $0x38] sm:$0xff]
          %v322 = vadd.f32 %v297, 0.0
          %v323 = vadd.f32 %v298, 0.0
          %v324 = vadd.f32 %v299, 0.0
          %v325 = vadd.f32 %v300, 0.0
          %v326 = vadd.f32 %v301, 0.0
          %v327 = vadd.f32 %v302, 0.0
          %v328 = vadd.f32 %v303, 0.0
          %v329 = vadd.f32 %v304, 0.0
          %v330 = vadd.f32 %v314, %v322
          %v331 = vadd.f32 %v315, %v323
          %v332 = vadd.f32 %v316, %v324
          %v333 = vadd.f32 %v317, %v325
          %v334 = vadd.f32 %v318, %v326
          %v335 = vadd.f32 %v319, %v327
          %v336 = vadd.f32 %v320, %v328
          %v337 = vadd.f32 %v321, %v329
          %338 = vst [vmem:[#allocation7] sm:$0xff] %v330
          %339 = vst [vmem:[#allocation7 + $0x8] sm:$0xff] %v331
          %340 = vst [vmem:[#allocation7 + $0x10] sm:$0xff] %v332
          %341 = vst [vmem:[#allocation7 + $0x18] sm:$0xff] %v333
          %342 = vst [vmem:[#allocation7 + $0x20] sm:$0xff] %v334
          %343 = vst [vmem:[#allocation7 + $0x28] sm:$0xff] %v335
          %344 = vst [vmem:[#allocation7 + $0x30] sm:$0xff] %v336
          %345 = vst [vmem:[#allocation7 + $0x38] sm:$0xff] %v337
        $region44: #{tpu_custom_call.1} parent=27 // pred_fallthru
          _
        // Predicated region
        $region45: #{tpu_custom_call.1} parent=27 // pred_check
          %p346 = pneg %p309
        $region46: #{tpu_custom_call.1} parent=27 // pred_check_branch
          %348 = sbr.rel (%p346) target = $region48
        $region47: #{tpu_custom_call.1} parent=27 // pred_region
          %v349 = vlaneseq
          %v350 = vshrl.u32 %v349, 7
          %v351 = vadd.s32 %v350, 8
          %v352 = vadd.s32 %v350, 16
          %v353 = vadd.s32 %v350, 24
          %v354 = vadd.s32 %v350, 32
          %v355 = vadd.s32 %v350, 40
          %v356 = vadd.s32 %v350, 48
          %v357 = vadd.s32 %v350, 56
          %v358 = vstv %s307
          %v359 = vadd.s32 %v358, %v350
          %v360 = vadd.s32 %v358, %v351
          %v361 = vadd.s32 %v358, %v352
          %v362 = vadd.s32 %v358, %v353
          %v363 = vadd.s32 %v358, %v354
          %v364 = vadd.s32 %v358, %v355
          %v365 = vadd.s32 %v358, %v356
          %v366 = vadd.s32 %v358, %v357
          %vm367 = vcmp.lt.s32.totalorder %v359, 96
          %vm368 = vcmp.lt.s32.totalorder %v360, 96
          %vm369 = vcmp.lt.s32.totalorder %v361, 96
          %vm370 = vcmp.lt.s32.totalorder %v362, 96
          %vm371 = vcmp.lt.s32.totalorder %v363, 96
          %vm372 = vcmp.lt.s32.totalorder %v364, 96
          %vm373 = vcmp.lt.s32.totalorder %v365, 96
          %vm374 = vcmp.lt.s32.totalorder %v366, 96
          %v375 = vsel %vm367, %v297, 0.0
          %v376 = vsel %vm368, %v298, 0.0
          %v377 = vsel %vm369, %v299, 0.0
          %v378 = vsel %vm370, %v300, 0.0
          %v379 = vsel %vm371, %v301, 0.0
          %v380 = vsel %vm372, %v302, 0.0
          %v381 = vsel %vm373, %v303, 0.0
          %v382 = vsel %vm374, %v304, 0.0
          %v383 = vld [vmem:[#allocation7] sm:$0xff]
          %v384 = vld [vmem:[#allocation7 + $0x8] sm:$0xff]
          %v385 = vld [vmem:[#allocation7 + $0x10] sm:$0xff]
          %v386 = vld [vmem:[#allocation7 + $0x18] sm:$0xff]
          %v387 = vld [vmem:[#allocation7 + $0x20] sm:$0xff]
          %v388 = vld [vmem:[#allocation7 + $0x28] sm:$0xff]
          %v389 = vld [vmem:[#allocation7 + $0x30] sm:$0xff]
          %v390 = vld [vmem:[#allocation7 + $0x38] sm:$0xff]
          %v391 = vadd.f32 %v375, 0.0
          %v392 = vadd.f32 %v376, 0.0
          %v393 = vadd.f32 %v377, 0.0
          %v394 = vadd.f32 %v378, 0.0
          %v395 = vadd.f32 %v379, 0.0
          %v396 = vadd.f32 %v380, 0.0
          %v397 = vadd.f32 %v381, 0.0
          %v398 = vadd.f32 %v382, 0.0
          %v399 = vadd.f32 %v383, %v391
          %v400 = vadd.f32 %v384, %v392
          %v401 = vadd.f32 %v385, %v393
          %v402 = vadd.f32 %v386, %v394
          %v403 = vadd.f32 %v387, %v395
          %v404 = vadd.f32 %v388, %v396
          %v405 = vadd.f32 %v389, %v397
          %v406 = vadd.f32 %v390, %v398
          %407 = vst [vmem:[#allocation7] sm:$0xff] %v399
          %408 = vst [vmem:[#allocation7 + $0x8] sm:$0xff] %v400
          %409 = vst [vmem:[#allocation7 + $0x10] sm:$0xff] %v401
          %410 = vst [vmem:[#allocation7 + $0x18] sm:$0xff] %v402
          %411 = vst [vmem:[#allocation7 + $0x20] sm:$0xff] %v403
          %412 = vst [vmem:[#allocation7 + $0x28] sm:$0xff] %v404
          %413 = vst [vmem:[#allocation7 + $0x30] sm:$0xff] %v405
          %414 = vst [vmem:[#allocation7 + $0x38] sm:$0xff] %v406
        $region48: #{tpu_custom_call.1} parent=27 // pred_fallthru
          _
        // Predicated region
        $region49: #{tpu_custom_call.1} parent=27 // pred_check
          %p415 = pneg %p118
        $region50: #{tpu_custom_call.1} parent=27 // pred_check_branch
          %417 = sbr.rel (%p415) target = $region52
        $region51: #{tpu_custom_call.1} parent=27 // pred_region
          %s419 = ssub.s32 1024, 1024
          %420 = vsyncadd [#allocation4], %s419
          %s421 = smul.addr %s24, 8
          %s422 = smul.addr %s421, 128
          %s423 = scalar_lea.hbm %s2, %s422
          %s424 = sshll.u32 [#allocation7], 4
          %s425 = int_to_ptr.vmem [resolvable:$true] %s424
          %430 = dma.vmem_to_hbm [thread:$0]  %s425, 1024, %s423, [#allocation4], 128, 128, 8
        $region52: #{tpu_custom_call.1} parent=27 // pred_fallthru
          _
        // Predicated region
        $region53: #{tpu_custom_call.1} parent=27 // pred_check
          %p431 = pneg %p118
        $region54: #{tpu_custom_call.1} parent=27 // pred_check_branch
          %433 = sbr.rel (%p431) target = $region56
        $region55: #{tpu_custom_call.1} parent=27 // pred_region
          %434 = dma.done [#allocation4], 1024
        $region56: #{tpu_custom_call.1} parent=27 // pred_fallthru
          _
      $region28: #{tpu_custom_call.1} parent=5 // pred_fallthru
        _
      %p435 = scmp.le.s32.totalorder 2, %s15
      // Predicated region
      $region57: #{tpu_custom_call.1} parent=5 // pred_check
        %p436 = pneg %p435
      $region58: #{tpu_custom_call.1} parent=5 // pred_check_branch
        %438 = sbr.rel (%p436) target = $region60
      $region59: #{tpu_custom_call.1} parent=5 // pred_region
        %s439 = ssub.s32 %s15, 2
      $region60: #{tpu_custom_call.1} parent=5 // pred_fallthru
        _
    $region6: #{tpu_custom_call.1} parent=1 // loop_footer
      %s19 = sadd.s32 1, %s15
    $region7: #{tpu_custom_call.1} parent=1 // loop_footer_branch
      %14 = sbr.rel target = $region3
    $region8: #{tpu_custom_call.1} parent=1 // loop_exit
      _
    %440 = vsyncpa [#allocation3], 1
    %s441 = scalar_lea.sflag [#allocation3], 1
    %442 = vsyncpa %s441, 1
    %443 = vsyncpa [#allocation6], 1
    %s444 = scalar_lea.sflag [#allocation6], 1
    %445 = vsyncpa %s444, 1
    %446 = vsyncpa [#allocation4], 1
    %s447 = scalar_lea.sflag [#allocation4], 1
    %448 = vsyncpa %s447, 1

</llo_original>
